<compile_context>
chip_gen: v7x
topology: tpu7x:2x2x1
jax: 0.10.0
libtpu: 0.0.40
codegen_flags: <defaults>
</compile_context>

<pallas_src>
import math
import functools

import jax
import jax.numpy as jnp
from jax import lax
from jax.experimental import pallas as pl
from jax.experimental.pallas import tpu as pltpu


def _selfatt_kernel(q_ref, k_ref, v_ref, mask_ref, o_ref, *, scale, m, T, form):
    # blocks: q/k/v -> (Bb, T, C), mask -> (Bb, T, 1), out -> (1, 1, Bb)
    q = q_ref[...]                                    # native dtype (bf16/f32)
    k = k_ref[...]
    v = v_ref[...]
    msk = mask_ref[...].astype(jnp.float32)           # (Bb, T, 1)

    # energy[b, t, s] = q[b, t, :] . k[b, s, :]   (MXU, f32 accumulation)
    s = jnp.einsum('btc,bsc->bts', q, k,
                   preferred_element_type=jnp.float32)        # (Bb, T, T)
    s = s * scale

    if m > 0:
        row = lax.broadcasted_iota(jnp.int32, (T, T), 0)
        col = lax.broadcasted_iota(jnp.int32, (T, T), 1)
        band = (col >= row - m) & (col <= row + m)
        # fused select instead of additive -1e10 (same softmax result)
        s = jnp.where(band[None], s, -1.0e10)

    # numerically stable softmax numerator; defer the 1/l normalization
    s_max = jnp.max(s, axis=-1, keepdims=True)                # (Bb, T, 1)
    p = jnp.exp(s - s_max)                                    # (Bb, T, T) f32
    l = jnp.sum(p, axis=-1, keepdims=True)                    # (Bb, T, 1)
    inv_l = pl.reciprocal(l, approx=True)                     # (Bb, T, 1)

    if form == 'sum':
        # sum_C((p @ v)/l * mask) == (p @ sum_C(v)) / l * mask
        v_sum = jnp.sum(v.astype(jnp.float32), axis=-1)       # (Bb, T)
        num = jnp.sum(p * v_sum[:, None, :], axis=-1,
                      keepdims=True)                          # (Bb, T, 1)
        red = jnp.sum(num * inv_l * msk, axis=-1)             # (Bb, T)
        out = jnp.sum(red, axis=-1)                           # (Bb,)
    elif form == 'max':
        pv = jnp.einsum('bts,bsc->btc', p.astype(v.dtype), v,
                        preferred_element_type=jnp.float32)   # (Bb, T, C)
        lin = pv * (inv_l * msk)                              # (Bb, T, C)
        red = jnp.max(lin, axis=-1)                           # (Bb, T)
        out = jnp.sum(red, axis=-1)                           # (Bb,)
    else:
        raise ValueError(f"unknown selfatt_form: {form}")

    o_ref[...] = out[None, None, :].astype(o_ref.dtype)       # (1, 1, Bb)


def _per_batch_vmem_bytes(T, C, itemsize):
    # double-buffered inputs (q, k, v, mask) + f32 intermediates (p, p@v)
    inputs = 2 * (3 * T * C * itemsize + T * 4)
    interm = 2 * 4 * T * T + 2 * 4 * T * C
    return inputs + interm


def _pick_batch_block(B, T, C, itemsize, budget_bytes=20 * 1024 * 1024):
    per_b = max(1, _per_batch_vmem_bytes(T, C, itemsize))
    return int(max(1, min(B, budget_bytes // per_b)))


def selfatt_forward(query, keys, values, mask, *, num_tags, m=0, form='max'):
    """Pallas equivalent of selfatt(num_tags, form).forward(q, k, v, mask, m)."""
    B, T, C = query.shape
    scale = 1.0 / math.sqrt(num_tags)

    dtype = query.dtype
    keys = keys.astype(dtype)
    values = values.astype(dtype)
    itemsize = jnp.dtype(dtype).itemsize

    bb = _pick_batch_block(B, T, C, itemsize)       # batch elems per grid step
    nb = -(-B // bb)                                # cdiv
    b_pad = nb * bb

    mask3 = mask.reshape(B, T, 1).astype(jnp.float32)
    if b_pad != B:
        pad = ((0, b_pad - B), (0, 0), (0, 0))
        query = jnp.pad(query, pad)
        keys = jnp.pad(keys, pad)
        values = jnp.pad(values, pad)
        mask3 = jnp.pad(mask3, pad)                 # zero mask -> zero output

    kernel = functools.partial(_selfatt_kernel, scale=scale, m=int(m), T=T,
                               form=form)

    # advisory cost estimate for the XLA scheduler
    mm2_flops = 2 * B * T * T * C if form == 'max' else 2 * B * T * T
    cost = pl.CostEstimate(
        flops=2 * B * T * T * C + mm2_flops,
        transcendentals=B * T * T + B * T,
        bytes_accessed=3 * B * T * C * itemsize + B * T * 4 + B * 4,
    )

    est = bb * _per_batch_vmem_bytes(T, C, itemsize)
    vmem_limit = int(min(48 * 2**20, max(32 * 2**20, 2 * est)))

    out = pl.pallas_call(
        kernel,
        out_shape=jax.ShapeDtypeStruct((nb, 1, bb), jnp.float32),
        grid_spec=pltpu.PrefetchScalarGridSpec(
            num_scalar_prefetch=0,
            grid=(nb,),
            in_specs=[
                pl.BlockSpec((bb, T, C), lambda b: (b, 0, 0)),   # query
                pl.BlockSpec((bb, T, C), lambda b: (b, 0, 0)),   # keys
                pl.BlockSpec((bb, T, C), lambda b: (b, 0, 0)),   # values
                pl.BlockSpec((bb, T, 1), lambda b: (b, 0, 0)),   # mask
            ],
            out_specs=pl.BlockSpec((1, 1, bb), lambda b: (b, 0, 0)),
        ),
        compiler_params=pltpu.CompilerParams(
            dimension_semantics=("parallel",),
            vmem_limit_bytes=vmem_limit),
        cost_estimate=cost,
    )(query, keys, values, mask3)

    return out.reshape(b_pad)[:B]


def _selfatt_ref(query, keys, values, mask, *, num_tags, m=0, form='max'):
    """Pure-JAX reference mirroring the PyTorch forward (f32 math)."""
    B, T, C = query.shape
    scale = 1.0 / math.sqrt(num_tags)
    energy = jnp.einsum('btc,bsc->bts', query, keys)
    if m > 0:
        i = jnp.arange(T)[:, None]
        j = jnp.arange(T)[None, :]
        band = (j >= i - m) & (j <= i + m)
        energy = energy + jnp.where(band, 0.0, -1.0e10)[None]
    p = jax.nn.softmax(energy * scale, axis=2)
    lin = jnp.einsum('bts,bsc->btc', p, values) * mask[:, :, None]
    if form == 'max':
        return lin.max(axis=2).sum(axis=1)
    return lin.sum(axis=2).sum(axis=1)


if __name__ == "__main__":
    B, T, C = 2, 8, 32
    num_tags = C

    key = jax.random.PRNGKey(0)
    kq, kk, kv, km = jax.random.split(key, 4)
    q32 = jax.random.normal(kq, (B, T, C), dtype=jnp.float32)
    k32 = jax.random.normal(kk, (B, T, C), dtype=jnp.float32)
    v32 = jax.random.normal(kv, (B, T, C), dtype=jnp.float32)
    mask = (jax.random.uniform(km, (B, T)) > 0.25).astype(jnp.float32)

    # (dtype, atol, rtol) — bf16 path uses bf16 DMA/MXU with f32 accumulation
    configs = ((jnp.float32, 1e-2, 2e-2), (jnp.bfloat16, 3e-2, 5e-2))
    for dtype, atol, rtol in configs:
        q = q32.astype(dtype)
        k = k32.astype(dtype)
        v = v32.astype(dtype)
        for form in ('max', 'sum'):
            for m in (0, 2):
                out = selfatt_forward(q, k, v, mask,
                                      num_tags=num_tags, m=m, form=form)
                out = jax.block_until_ready(out)
                ref = _selfatt_ref(q.astype(jnp.float32), k.astype(jnp.float32),
                                   v.astype(jnp.float32), mask,
                                   num_tags=num_tags, m=m, form=form)
                assert out.shape == (B,)
                err = float(jnp.max(jnp.abs(out - ref)))
                tol = atol + rtol * float(jnp.max(jnp.abs(ref)))
                assert err <= tol, (str(dtype), form, m, err, tol, out, ref)

    print("KERNEL_OK")
</pallas_src>

<mosaic_0001>
module attributes {stable_mosaic.version = 11 : i64} {
  func.func @_selfatt_kernel(%arg0: i32, %arg1: memref<2x8x32xf32, #tpu.memory_space<vmem>>, %arg2: memref<2x8x32xf32, #tpu.memory_space<vmem>>, %arg3: memref<2x8x32xf32, #tpu.memory_space<vmem>>, %arg4: memref<2x8x1xf32, #tpu.memory_space<vmem>>, %arg5: memref<1x1x2xf32, #tpu.memory_space<vmem>>) attributes {dimension_semantics = [#tpu.dimension_semantics<parallel>], iteration_bounds = array<i64: 1>, scalar_prefetch = 0 : i64, scratch_operands = 0 : i64, tpu.core_type = #tpu.core_type<tc>, window_params = [{transform_indices = @transform_0, window_bounds = array<i64: 2, 8, 32>}, {transform_indices = @transform_1, window_bounds = array<i64: 2, 8, 32>}, {transform_indices = @transform_2, window_bounds = array<i64: 2, 8, 32>}, {transform_indices = @transform_3, window_bounds = array<i64: 2, 8, 1>}, {transform_indices = @transform_4, window_bounds = array<i64: 1, 1, 2>}]} {
    %c0 = arith.constant 0 : index
    %c0_0 = arith.constant 0 : index
    %c0_1 = arith.constant 0 : index
    %0 = vector.load %arg1[%c0, %c0_0, %c0_1] : memref<2x8x32xf32, #tpu.memory_space<vmem>>, vector<2x8x32xf32>
    %c0_2 = arith.constant 0 : index
    %c0_3 = arith.constant 0 : index
    %c0_4 = arith.constant 0 : index
    %1 = vector.load %arg2[%c0_2, %c0_3, %c0_4] : memref<2x8x32xf32, #tpu.memory_space<vmem>>, vector<2x8x32xf32>
    %c0_5 = arith.constant 0 : index
    %c0_6 = arith.constant 0 : index
    %c0_7 = arith.constant 0 : index
    %2 = vector.load %arg3[%c0_5, %c0_6, %c0_7] : memref<2x8x32xf32, #tpu.memory_space<vmem>>, vector<2x8x32xf32>
    %c0_8 = arith.constant 0 : index
    %c0_9 = arith.constant 0 : index
    %c0_10 = arith.constant 0 : index
    %3 = vector.load %arg4[%c0_8, %c0_9, %c0_10] : memref<2x8x1xf32, #tpu.memory_space<vmem>>, vector<2x8x1xf32>
    "tpu.trace_start"() <{level = 10 : i32, message = "btc,bsc->bts"}> : () -> ()
    %cst = arith.constant dense<0.000000e+00> : vector<2x8x8xf32>
    %4 = tpu.matmul %0, %1, %cst {dimension_numbers = #tpu.dot_dimension_numbers<[2], [2], [1], [1], [0, 0, 0, 1, 1, 1], [0], [0]>} : vector<2x8x32xf32>, vector<2x8x32xf32>, vector<2x8x8xf32> -> vector<2x8x8xf32>
    "tpu.trace_stop"() : () -> ()
    %cst_11 = arith.constant 0.176776692 : f32
    %5 = vector.broadcast %cst_11 : f32 to vector<2x8x8xf32>
    %6 = arith.mulf %4, %5 : vector<2x8x8xf32>
    %cst_12 = arith.constant dense<0xFF800000> : vector<2x8xf32>
    %7 = vector.multi_reduction <maximumf>, %6, %cst_12 [2] : vector<2x8x8xf32> to vector<2x8xf32>
    %8 = vector.shape_cast %7 : vector<2x8xf32> to vector<2x8x1xf32>
    %9 = vector.broadcast %8 : vector<2x8x1xf32> to vector<2x8x8xf32>
    %10 = arith.subf %6, %9 : vector<2x8x8xf32>
    %11 = math.exp %10 : vector<2x8x8xf32>
    %cst_13 = arith.constant dense<0.000000e+00> : vector<2x8xf32>
    %12 = vector.multi_reduction <add>, %11, %cst_13 [2] : vector<2x8x8xf32> to vector<2x8xf32>
    %13 = vector.shape_cast %12 : vector<2x8xf32> to vector<2x8x1xf32>
    %14 = tpu.reciprocal %13 {approx = true} : vector<2x8x1xf32> -> vector<2x8x1xf32>
    "tpu.trace_start"() <{level = 10 : i32, message = "bts,bsc->btc"}> : () -> ()
    %cst_14 = arith.constant dense<0.000000e+00> : vector<2x8x32xf32>
    %15 = tpu.matmul %11, %2, %cst_14 {dimension_numbers = #tpu.dot_dimension_numbers<[2], [1], [1], [2], [0, 0, 0, 1, 1, 2], [0], [0]>} : vector<2x8x8xf32>, vector<2x8x32xf32>, vector<2x8x32xf32> -> vector<2x8x32xf32>
    "tpu.trace_stop"() : () -> ()
    %16 = arith.mulf %14, %3 : vector<2x8x1xf32>
    %17 = vector.broadcast %16 : vector<2x8x1xf32> to vector<2x8x32xf32>
    %18 = arith.mulf %15, %17 : vector<2x8x32xf32>
    %cst_15 = arith.constant dense<0xFF800000> : vector<2x8xf32>
    %19 = vector.multi_reduction <maximumf>, %18, %cst_15 [2] : vector<2x8x32xf32> to vector<2x8xf32>
    %cst_16 = arith.constant dense<0.000000e+00> : vector<2xf32>
    %20 = vector.multi_reduction <add>, %19, %cst_16 [1] : vector<2x8xf32> to vector<2xf32>
    %21 = vector.shape_cast %20 : vector<2xf32> to vector<1x1x2xf32>
    %c0_17 = arith.constant 0 : index
    %c0_18 = arith.constant 0 : index
    %c0_19 = arith.constant 0 : index
    %22 = vector.load %arg5[%c0_17, %c0_18, %c0_19] : memref<1x1x2xf32, #tpu.memory_space<vmem>>, vector<1x1x2xf32>
    tpu.vector_store %arg5[%c0_17, %c0_18, %c0_19], %21 {strides = array<i32>} : memref<1x1x2xf32, #tpu.memory_space<vmem>>, vector<1x1x2xf32>,
    return
  }
  func.func @transform_0(%arg0: i32) -> (i32, i32, i32) {
    %c0_i32 = arith.constant 0 : i32
    %c0_i32_0 = arith.constant 0 : i32
    %c0_i32_1 = arith.constant 0 : i32
    return %arg0, %c0_i32, %c0_i32_0 : i32, i32, i32
  }
  func.func @transform_1(%arg0: i32) -> (i32, i32, i32) {
    %c0_i32 = arith.constant 0 : i32
    %c0_i32_0 = arith.constant 0 : i32
    %c0_i32_1 = arith.constant 0 : i32
    return %arg0, %c0_i32, %c0_i32_0 : i32, i32, i32
  }
  func.func @transform_2(%arg0: i32) -> (i32, i32, i32) {
    %c0_i32 = arith.constant 0 : i32
    %c0_i32_0 = arith.constant 0 : i32
    %c0_i32_1 = arith.constant 0 : i32
    return %arg0, %c0_i32, %c0_i32_0 : i32, i32, i32
  }
  func.func @transform_3(%arg0: i32) -> (i32, i32, i32) {
    %c0_i32 = arith.constant 0 : i32
    %c0_i32_0 = arith.constant 0 : i32
    %c0_i32_1 = arith.constant 0 : i32
    return %arg0, %c0_i32, %c0_i32_0 : i32, i32, i32
  }
  func.func @transform_4(%arg0: i32) -> (i32, i32, i32) {
    %c0_i32 = arith.constant 0 : i32
    %c0_i32_0 = arith.constant 0 : i32
    %c0_i32_1 = arith.constant 0 : i32
    return %arg0, %c0_i32, %c0_i32_0 : i32, i32, i32
  }
}

</mosaic_0001>

<llo_original>
// kernel: tpu_custom_call.1
$region0: #{tpu_custom_call.1}
  #allocation0 [shape = 'u32[]', space=smem, size = 0x4, offset = 0x4, fixed_abs, tag = 'smem constant byte address 0x4 - core index']
  #allocation1 [shape = 'u32[144,128]{1,0:T(1,128)}', space=vmem, size = 0x12000, scoped, tag = 'internal scratch']
  %s0 = inlined_call_operand.vmem [shape: f32[2,8,32], index: 0, kind: input, shape index: {}]
  %s1 = inlined_call_operand.hbm [shape: f32[2,8,32], index: 1, kind: input, shape index: {}]
  %s2 = inlined_call_operand.hbm [shape: f32[2,8,32], index: 2, kind: input, shape index: {}]
  %s3 = inlined_call_operand.vmem [shape: f32[2,8,1], index: 3, kind: input, shape index: {}]
  %s4 = inlined_call_operand.hbm [shape: f32[1,1,2], index: 4, kind: output, shape index: {}]
  %s5 = sld [smem:[#allocation0]]
  $region34: #{tpu_custom_call.1} parent=0
    _
  %s7 = ssub.s32 1, %s5
  %s8 = scalar_select 0, %s7, %s5
  $region1: #{tpu_custom_call.1} parent=0
    #allocation2 [shape = 'u8[8192]{0}', space=vmem, size = 0x2000, scoped, tag = 'input window, operand 1, single buffered']
    #allocation3 [shape = 's32[1]{0}', space=sflag, size = 0x4, scoped, tag = 'scoped memory for tpu_custom_call.1']
    #allocation4 [shape = 's32[1]{0}', space=sflag, size = 0x4, scoped, tag = 'scoped memory for tpu_custom_call.1']
    #allocation5 [shape = 'u8[8192]{0}', space=vmem, size = 0x2000, scoped, tag = 'input window, operand 2, single buffered']
    #allocation6 [shape = 's32[1]{0}', space=sflag, size = 0x4, scoped, tag = 'scoped memory for tpu_custom_call.1']
    #allocation7 [shape = 'u8[512]{0}', space=vmem, size = 0x400, scoped, tag = 'output window, operand 0, single buffered']
    %9 = vsyncpa [#allocation3], 0
    %10 = vsyncpa [#allocation6], 0
    %11 = vsyncpa [#allocation4], 0
    // Predicated region
    $region2: #{tpu_custom_call.1} parent=1 // pred_check
      _
    $region3: #{tpu_custom_call.1} parent=1 // pred_check_branch
      %13 = sbr.rel (0) target = $region5
    $region4: #{tpu_custom_call.1} parent=1 // pred_region
      _
    $region5: #{tpu_custom_call.1} parent=1 // pred_fallthru
      _
    // Predicated region
    $region6: #{tpu_custom_call.1} parent=1 // pred_check
      _
    $region7: #{tpu_custom_call.1} parent=1 // pred_check_branch
      %15 = sbr.rel (0) target = $region9
    $region8: #{tpu_custom_call.1} parent=1 // pred_region
      %s17 = ssub.s32 256, 256
      %18 = vsyncadd [#allocation3], %s17
      %s19 = sshll.u32 [#allocation2], 4
      %s20 = int_to_ptr.vmem [resolvable:$true] %s19
      %25 = dma.hbm_to_vmem [thread:$0]  %s1, 256, %s20, [#allocation3], 128, 128, 8
    $region9: #{tpu_custom_call.1} parent=1 // pred_fallthru
      _
    // Predicated region
    $region10: #{tpu_custom_call.1} parent=1 // pred_check
      _
    $region11: #{tpu_custom_call.1} parent=1 // pred_check_branch
      %27 = sbr.rel (0) target = $region13
    $region12: #{tpu_custom_call.1} parent=1 // pred_region
      %s29 = ssub.s32 256, 256
      %30 = vsyncadd [#allocation6], %s29
      %s31 = sshll.u32 [#allocation5], 4
      %s32 = int_to_ptr.vmem [resolvable:$true] %s31
      %37 = dma.hbm_to_vmem [thread:$0]  %s2, 256, %s32, [#allocation6], 128, 128, 8
    $region13: #{tpu_custom_call.1} parent=1 // pred_fallthru
      _
    // Predicated region
    $region14: #{tpu_custom_call.1} parent=1 // pred_check
      _
    $region15: #{tpu_custom_call.1} parent=1 // pred_check_branch
      %39 = sbr.rel (0) target = $region17
    $region16: #{tpu_custom_call.1} parent=1 // pred_region
      _
    $region17: #{tpu_custom_call.1} parent=1 // pred_fallthru
      _
    // Predicated region
    $region18: #{tpu_custom_call.1} parent=1 // pred_check
      _
    $region19: #{tpu_custom_call.1} parent=1 // pred_check_branch
      %41 = sbr.rel (0) target = $region21
    $region20: #{tpu_custom_call.1} parent=1 // pred_region
      %42 = dma.done [#allocation3], 256
    $region21: #{tpu_custom_call.1} parent=1 // pred_fallthru
      _
    // Predicated region
    $region22: #{tpu_custom_call.1} parent=1 // pred_check
      _
    $region23: #{tpu_custom_call.1} parent=1 // pred_check_branch
      %44 = sbr.rel (0) target = $region25
    $region24: #{tpu_custom_call.1} parent=1 // pred_region
      %45 = dma.done [#allocation6], 256
    $region25: #{tpu_custom_call.1} parent=1 // pred_fallthru
      _
    %v46 = vld [vmem:[%s0] sm:$0xff]
    %v47 = vld [vmem:[%s0 + $0x8] sm:$0xff]
    %v48 = vld [vmem:[#allocation2] sm:$0xff]
    %v49 = vld [vmem:[#allocation2 + $0x8] sm:$0xff]
    %v50 = vld [vmem:[#allocation5] sm:$0xff]
    %v51 = vld [vmem:[#allocation5 + $0x8] sm:$0xff]
    %v52 = vld [vmem:[%s3] sm:$0xff]
    %v53 = vld [vmem:[%s3 + $0x8] sm:$0xff]
    %vm54 = vcmask 261120
    %v56 = vsel %vm54, %v46, 0
    %v59 = vsel %vm54, %v48, 0
    %61 = vmatprep.subr.mxu0 0.0
    %62 = vmatpush1.xpose.msra.mxu0 %v59
    %63 = vmatprep.subr.mxu0 0.0
    %64 = vmatpush1.xpose.msra.mxu0 0.0
    %65 = vmatprep.subr.mxu0 0.0
    %66 = vmatpush1.xpose.msra.mxu0 0.0
    %67 = vmatprep.subr.mxu0 0.0
    %68 = vmatpush1.xpose.msra.mxu0 0.0
    %69 = vmatprep.subr.mxu0 0.0
    %70 = vmatpush1.xpose.msra.mxu0 0.0
    %71 = vmatprep.subr.mxu0 0.0
    %72 = vmatpush1.xpose.msra.mxu0 0.0
    %73 = vmatprep.subr.mxu0 0.0
    %74 = vmatpush1.xpose.msra.mxu0 0.0
    %75 = vmatprep.subr.mxu0 0.0
    %76 = vmatpush1.xpose.msra.mxu0 0.0
    %77 = vmatprep.subr.mxu0 0.0
    %78 = vmatpush1.xpose.msra.mxu0 0.0
    %79 = vmatprep.subr.mxu0 0.0
    %80 = vmatpush1.xpose.msra.mxu0 0.0
    %81 = vmatprep.subr.mxu0 0.0
    %82 = vmatpush1.xpose.msra.mxu0 0.0
    %83 = vmatprep.subr.mxu0 0.0
    %84 = vmatpush1.xpose.msra.mxu0 0.0
    %85 = vmatprep.subr.mxu0 0.0
    %86 = vmatpush1.xpose.msra.mxu0 0.0
    %87 = vmatprep.subr.mxu0 0.0
    %88 = vmatpush1.xpose.msra.mxu0 0.0
    %89 = vmatprep.subr.mxu0 0.0
    %90 = vmatpush1.xpose.msra.mxu0 0.0
    %91 = vmatprep.subr.mxu0 0.0
    %92 = vmatpush1.xpose.msra.mxu0 0.0
    %93 = vmatprep.subr.mxu0 0.0
    %94 = vmatpush1.xpose.msra.mxu0 0.0
    %95 = vmatprep.subr.mxu0 0.0
    %96 = vmatpush1.xpose.msra.mxu0 0.0
    %97 = vmatprep.subr.mxu0 0.0
    %98 = vmatpush1.xpose.msra.mxu0 0.0
    %99 = vmatprep.subr.mxu0 0.0
    %100 = vmatpush1.xpose.msra.mxu0 0.0
    %101 = vmatprep.subr.mxu0 0.0
    %102 = vmatpush1.xpose.msra.mxu0 0.0
    %103 = vmatprep.subr.mxu0 0.0
    %104 = vmatpush1.xpose.msra.mxu0 0.0
    %105 = vmatprep.subr.mxu0 0.0
    %106 = vmatpush1.xpose.msra.mxu0 0.0
    %107 = vmatprep.subr.mxu0 0.0
    %108 = vmatpush1.xpose.msra.mxu0 0.0
    %109 = vmatprep.subr.mxu0 0.0
    %110 = vmatpush1.xpose.msra.mxu0 0.0
    %111 = vmatprep.subr.mxu0 0.0
    %112 = vmatpush1.xpose.msra.mxu0 0.0
    %113 = vmatprep.subr.mxu0 0.0
    %114 = vmatpush1.xpose.msra.mxu0 0.0
    %115 = vmatprep.subr.mxu0 0.0
    %116 = vmatpush1.xpose.msra.mxu0 0.0
    %117 = vmatprep.subr.mxu0 0.0
    %118 = vmatpush1.xpose.msra.mxu0 0.0
    %119 = vmatprep.subr.mxu0 0.0
    %120 = vmatpush1.xpose.msra.mxu0 0.0
    %121 = vmatprep.subr.mxu0 0.0
    %122 = vmatpush1.xpose.msra.mxu0 0.0
    %123 = vmatprep.subr.mxu0 0.0
    %124 = vmatpush1.xpose.msra.mxu0 0.0
    %125 = vmatprep.mubr.f32.mxu0 0.0
    %126 = vmatmul.mubr.f32.gmra.mrb[0].mxu0 %v56
    %v127 = vpop.f32.mrb[0].mxu0
    %v128 = vadd.f32 0.0, %v127
    %v129 = vpop.f32.mrb[0].mxu0
    %130 = vdwg.mxu0
    %v132 = vsel %vm54, %v47, 0
    %v135 = vsel %vm54, %v49, 0
    %137 = vmatprep.subr.mxu0 0.0
    %138 = vmatpush1.xpose.msra.mxu0 %v135
    %139 = vmatprep.subr.mxu0 0.0
    %140 = vmatpush1.xpose.msra.mxu0 0.0
    %141 = vmatprep.subr.mxu0 0.0
    %142 = vmatpush1.xpose.msra.mxu0 0.0
    %143 = vmatprep.subr.mxu0 0.0
    %144 = vmatpush1.xpose.msra.mxu0 0.0
    %145 = vmatprep.subr.mxu0 0.0
    %146 = vmatpush1.xpose.msra.mxu0 0.0
    %147 = vmatprep.subr.mxu0 0.0
    %148 = vmatpush1.xpose.msra.mxu0 0.0
    %149 = vmatprep.subr.mxu0 0.0
    %150 = vmatpush1.xpose.msra.mxu0 0.0
    %151 = vmatprep.subr.mxu0 0.0
    %152 = vmatpush1.xpose.msra.mxu0 0.0
    %153 = vmatprep.subr.mxu0 0.0
    %154 = vmatpush1.xpose.msra.mxu0 0.0
    %155 = vmatprep.subr.mxu0 0.0
    %156 = vmatpush1.xpose.msra.mxu0 0.0
    %157 = vmatprep.subr.mxu0 0.0
    %158 = vmatpush1.xpose.msra.mxu0 0.0
    %159 = vmatprep.subr.mxu0 0.0
    %160 = vmatpush1.xpose.msra.mxu0 0.0
    %161 = vmatprep.subr.mxu0 0.0
    %162 = vmatpush1.xpose.msra.mxu0 0.0
    %163 = vmatprep.subr.mxu0 0.0
    %164 = vmatpush1.xpose.msra.mxu0 0.0
    %165 = vmatprep.subr.mxu0 0.0
    %166 = vmatpush1.xpose.msra.mxu0 0.0
    %167 = vmatprep.subr.mxu0 0.0
    %168 = vmatpush1.xpose.msra.mxu0 0.0
    %169 = vmatprep.subr.mxu0 0.0
    %170 = vmatpush1.xpose.msra.mxu0 0.0
    %171 = vmatprep.subr.mxu0 0.0
    %172 = vmatpush1.xpose.msra.mxu0 0.0
    %173 = vmatprep.subr.mxu0 0.0
    %174 = vmatpush1.xpose.msra.mxu0 0.0
    %175 = vmatprep.subr.mxu0 0.0
    %176 = vmatpush1.xpose.msra.mxu0 0.0
    %177 = vmatprep.subr.mxu0 0.0
    %178 = vmatpush1.xpose.msra.mxu0 0.0
    %179 = vmatprep.subr.mxu0 0.0
    %180 = vmatpush1.xpose.msra.mxu0 0.0
    %181 = vmatprep.subr.mxu0 0.0
    %182 = vmatpush1.xpose.msra.mxu0 0.0
    %183 = vmatprep.subr.mxu0 0.0
    %184 = vmatpush1.xpose.msra.mxu0 0.0
    %185 = vmatprep.subr.mxu0 0.0
    %186 = vmatpush1.xpose.msra.mxu0 0.0
    %187 = vmatprep.subr.mxu0 0.0
    %188 = vmatpush1.xpose.msra.mxu0 0.0
    %189 = vmatprep.subr.mxu0 0.0
    %190 = vmatpush1.xpose.msra.mxu0 0.0
    %191 = vmatprep.subr.mxu0 0.0
    %192 = vmatpush1.xpose.msra.mxu0 0.0
    %193 = vmatprep.subr.mxu0 0.0
    %194 = vmatpush1.xpose.msra.mxu0 0.0
    %195 = vmatprep.subr.mxu0 0.0
    %196 = vmatpush1.xpose.msra.mxu0 0.0
    %197 = vmatprep.subr.mxu0 0.0
    %198 = vmatpush1.xpose.msra.mxu0 0.0
    %199 = vmatprep.subr.mxu0 0.0
    %200 = vmatpush1.xpose.msra.mxu0 0.0
    %201 = vmatprep.mubr.f32.mxu0 0.0
    %202 = vmatmul.mubr.f32.gmra.mrb[0].mxu0 %v132
    %v203 = vpop.f32.mrb[0].mxu0
    %v204 = vadd.f32 0.0, %v203
    %v205 = vpop.f32.mrb[0].mxu0
    %206 = vdwg.mxu0
    %v207 = vmul.f32 %v128, 0.17677669
    %v208 = vmul.f32 %v204, 0.17677669
    %vm209 = vcmask 64512
    %v210 = vsel %vm209, %v207, -inf
    %211 = vmax.xlane.f32.xlu0 %v210
    %v212 = vpop.xlane.xlu0 %211
    %v213 = vsel %vm209, %v208, -inf
    %214 = vmax.xlane.f32.xlu0 %v213
    %v215 = vpop.xlane.xlu0 %214
    %v216 = vsub.f32 %v207, %v212
    %v217 = vsub.f32 %v208, %v215
    %v218 = vmul.f32 %v216, 1.442695
    %v219 = vpow.pop %v218
    %v220 = vmul.f32 %v217, 1.442695
    %v221 = vpow.pop %v220
    %v222 = vsel %vm209, %v219, 0.0
    %223 = vadd.xlane.f32.xlu0 %v222
    %v224 = vpop.xlane.xlu0 %223
    %v225 = vsel %vm209, %v221, 0.0
    %226 = vadd.xlane.f32.xlu0 %v225
    %v227 = vpop.xlane.xlu0 %226
    %v228 = vrcp.pop %v224
    %v229 = vrcp.pop %v227
    %v231 = vsel %vm209, %v219, 0
    %233 = vmatprep.subr.mxu0 0.0
    %234 = vmatpush1.msra.mxu0 %v50
    %235 = vmatprep.subr.mxu0 0.0
    %236 = vmatpush1.msra.mxu0 0.0
    %237 = vmatprep.subr.mxu0 0.0
    %238 = vmatpush1.msra.mxu0 0.0
    %239 = vmatprep.subr.mxu0 0.0
    %240 = vmatpush1.msra.mxu0 0.0
    %241 = vmatprep.subr.mxu0 0.0
    %242 = vmatpush1.msra.mxu0 0.0
    %243 = vmatprep.subr.mxu0 0.0
    %244 = vmatpush1.msra.mxu0 0.0
    %245 = vmatprep.subr.mxu0 0.0
    %246 = vmatpush1.msra.mxu0 0.0
    %247 = vmatprep.subr.mxu0 0.0
    %248 = vmatpush1.msra.mxu0 0.0
    %249 = vmatprep.subr.mxu0 0.0
    %250 = vmatpush1.msra.mxu0 0.0
    %251 = vmatprep.subr.mxu0 0.0
    %252 = vmatpush1.msra.mxu0 0.0
    %253 = vmatprep.subr.mxu0 0.0
    %254 = vmatpush1.msra.mxu0 0.0
    %255 = vmatprep.subr.mxu0 0.0
    %256 = vmatpush1.msra.mxu0 0.0
    %257 = vmatprep.subr.mxu0 0.0
    %258 = vmatpush1.msra.mxu0 0.0
    %259 = vmatprep.subr.mxu0 0.0
    %260 = vmatpush1.msra.mxu0 0.0
    %261 = vmatprep.subr.mxu0 0.0
    %262 = vmatpush1.msra.mxu0 0.0
    %263 = vmatprep.subr.mxu0 0.0
    %264 = vmatpush1.msra.mxu0 0.0
    %265 = vmatprep.subr.mxu0 0.0
    %266 = vmatpush1.msra.mxu0 0.0
    %267 = vmatprep.subr.mxu0 0.0
    %268 = vmatpush1.msra.mxu0 0.0
    %269 = vmatprep.subr.mxu0 0.0
    %270 = vmatpush1.msra.mxu0 0.0
    %271 = vmatprep.subr.mxu0 0.0
    %272 = vmatpush1.msra.mxu0 0.0
    %273 = vmatprep.subr.mxu0 0.0
    %274 = vmatpush1.msra.mxu0 0.0
    %275 = vmatprep.subr.mxu0 0.0
    %276 = vmatpush1.msra.mxu0 0.0
    %277 = vmatprep.subr.mxu0 0.0
    %278 = vmatpush1.msra.mxu0 0.0
    %279 = vmatprep.subr.mxu0 0.0
    %280 = vmatpush1.msra.mxu0 0.0
    %281 = vmatprep.subr.mxu0 0.0
    %282 = vmatpush1.msra.mxu0 0.0
    %283 = vmatprep.subr.mxu0 0.0
    %284 = vmatpush1.msra.mxu0 0.0
    %285 = vmatprep.subr.mxu0 0.0
    %286 = vmatpush1.msra.mxu0 0.0
    %287 = vmatprep.subr.mxu0 0.0
    %288 = vmatpush1.msra.mxu0 0.0
    %289 = vmatprep.subr.mxu0 0.0
    %290 = vmatpush1.msra.mxu0 0.0
    %291 = vmatprep.subr.mxu0 0.0
    %292 = vmatpush1.msra.mxu0 0.0
    %293 = vmatprep.subr.mxu0 0.0
    %294 = vmatpush1.msra.mxu0 0.0
    %295 = vmatprep.subr.mxu0 0.0
    %296 = vmatpush1.msra.mxu0 0.0
    %297 = vmatprep.mubr.f32.mxu0 0.0
    %298 = vmatmul.mubr.f32.gmra.mrb[0].mxu0 %v231
    %v299 = vpop.f32.mrb[0].mxu0
    %v300 = vadd.f32 0.0, %v299
    %v301 = vpop.f32.mrb[0].mxu0
    %302 = vdwg.mxu0
    %v304 = vsel %vm209, %v221, 0
    %306 = vmatprep.subr.mxu0 0.0
    %307 = vmatpush1.msra.mxu0 %v51
    %308 = vmatprep.subr.mxu0 0.0
    %309 = vmatpush1.msra.mxu0 0.0
    %310 = vmatprep.subr.mxu0 0.0
    %311 = vmatpush1.msra.mxu0 0.0
    %312 = vmatprep.subr.mxu0 0.0
    %313 = vmatpush1.msra.mxu0 0.0
    %314 = vmatprep.subr.mxu0 0.0
    %315 = vmatpush1.msra.mxu0 0.0
    %316 = vmatprep.subr.mxu0 0.0
    %317 = vmatpush1.msra.mxu0 0.0
    %318 = vmatprep.subr.mxu0 0.0
    %319 = vmatpush1.msra.mxu0 0.0
    %320 = vmatprep.subr.mxu0 0.0
    %321 = vmatpush1.msra.mxu0 0.0
    %322 = vmatprep.subr.mxu0 0.0
    %323 = vmatpush1.msra.mxu0 0.0
    %324 = vmatprep.subr.mxu0 0.0
    %325 = vmatpush1.msra.mxu0 0.0
    %326 = vmatprep.subr.mxu0 0.0
    %327 = vmatpush1.msra.mxu0 0.0
    %328 = vmatprep.subr.mxu0 0.0
    %329 = vmatpush1.msra.mxu0 0.0
    %330 = vmatprep.subr.mxu0 0.0
    %331 = vmatpush1.msra.mxu0 0.0
    %332 = vmatprep.subr.mxu0 0.0
    %333 = vmatpush1.msra.mxu0 0.0
    %334 = vmatprep.subr.mxu0 0.0
    %335 = vmatpush1.msra.mxu0 0.0
    %336 = vmatprep.subr.mxu0 0.0
    %337 = vmatpush1.msra.mxu0 0.0
    %338 = vmatprep.subr.mxu0 0.0
    %339 = vmatpush1.msra.mxu0 0.0
    %340 = vmatprep.subr.mxu0 0.0
    %341 = vmatpush1.msra.mxu0 0.0
    %342 = vmatprep.subr.mxu0 0.0
    %343 = vmatpush1.msra.mxu0 0.0
    %344 = vmatprep.subr.mxu0 0.0
    %345 = vmatpush1.msra.mxu0 0.0
    %346 = vmatprep.subr.mxu0 0.0
    %347 = vmatpush1.msra.mxu0 0.0
    %348 = vmatprep.subr.mxu0 0.0
    %349 = vmatpush1.msra.mxu0 0.0
    %350 = vmatprep.subr.mxu0 0.0
    %351 = vmatpush1.msra.mxu0 0.0
    %352 = vmatprep.subr.mxu0 0.0
    %353 = vmatpush1.msra.mxu0 0.0
    %354 = vmatprep.subr.mxu0 0.0
    %355 = vmatpush1.msra.mxu0 0.0
    %356 = vmatprep.subr.mxu0 0.0
    %357 = vmatpush1.msra.mxu0 0.0
    %358 = vmatprep.subr.mxu0 0.0
    %359 = vmatpush1.msra.mxu0 0.0
    %360 = vmatprep.subr.mxu0 0.0
    %361 = vmatpush1.msra.mxu0 0.0
    %362 = vmatprep.subr.mxu0 0.0
    %363 = vmatpush1.msra.mxu0 0.0
    %364 = vmatprep.subr.mxu0 0.0
    %365 = vmatpush1.msra.mxu0 0.0
    %366 = vmatprep.subr.mxu0 0.0
    %367 = vmatpush1.msra.mxu0 0.0
    %368 = vmatprep.subr.mxu0 0.0
    %369 = vmatpush1.msra.mxu0 0.0
    %370 = vmatprep.mubr.f32.mxu0 0.0
    %371 = vmatmul.mubr.f32.gmra.mrb[0].mxu0 %v304
    %v372 = vpop.f32.mrb[0].mxu0
    %v373 = vadd.f32 0.0, %v372
    %v374 = vpop.f32.mrb[0].mxu0
    %375 = vdwg.mxu0
    %v376 = vmul.f32 %v228, %v52
    %v377 = vmul.f32 %v229, %v53
    %379 = vset.pattern.permute.xlu0 0
    %380 = vperm.xlu0 %379, %v376
    %v381 = vpop.permute.xlu0 %380
    %384 = vset.pattern.permute.xlu0 0
    %385 = vperm.xlu0 %384, %v377
    %v386 = vpop.permute.xlu0 %385
    %v388 = vmul.f32 %v300, %v381
    %v389 = vmul.f32 %v373, %v386
    %v390 = vsel %vm54, %v388, -inf
    %391 = vmax.xlane.f32.xlu0 %v390
    %v392 = vpop.xlane.xlu0 %391
    %v393 = vsel %vm54, %v389, -inf
    %394 = vmax.xlane.f32.xlu0 %v393
    %v395 = vpop.xlane.xlu0 %394
    %v398 = vlaneseq
    %v399 = vand.u32 %v398, 127
    %v400 = vlaneseq
    %v401 = vshrl.u32 %v400, 7
    %v402 = vsub.s32 %v399, %v401
    %v403 = vrot.slane %v392, %v402
    %v404 = vlaneseq
    %v405 = vshrl.u32 %v404, 7
    %v406 = vsub.s32 %v399, %v405
    %v407 = vrot.slane %v395, %v406
    %vm408 = vcmask 1041409
    %v409 = vsel %vm408, %v407, %v403
    %vm411 = vcmask 58368
    %v412 = vsel %vm411, %v409, 0.0
    %413 = vadd.xlane.f32.xlu0 %v412
    %v414 = vpop.xlane.xlu0 %413
    %v416 = vlaneseq
    %v417 = vshrl.u32 %v416, 7
    %v418 = vsub.s32 %v399, %v417
    %v419 = vrot.slane %v414, %v418
    %vm421 = vcmask 8192
    %422 = vst.msk [vmem:[#allocation7] sm:$0x1] %vm421, %v419
    // Predicated region
    $region26: #{tpu_custom_call.1} parent=1 // pred_check
      _
    $region27: #{tpu_custom_call.1} parent=1 // pred_check_branch
      %424 = sbr.rel (0) target = $region29
    $region28: #{tpu_custom_call.1} parent=1 // pred_region
      %s426 = ssub.s32 16, 16
      %427 = vsyncadd [#allocation4], %s426
      %s429 = sshll.u32 [#allocation7], 4
      %s430 = int_to_ptr.vmem [resolvable:$true] %s429
      %432 = dma.vmem_to_hbm [thread:$0]  %s430, 16, %s4, [#allocation4]
    $region29: #{tpu_custom_call.1} parent=1 // pred_fallthru
      _
    // Predicated region
    $region30: #{tpu_custom_call.1} parent=1 // pred_check
      _
    $region31: #{tpu_custom_call.1} parent=1 // pred_check_branch
      %434 = sbr.rel (0) target = $region33
    $region32: #{tpu_custom_call.1} parent=1 // pred_region
      %435 = dma.done [#allocation4], 16
    $region33: #{tpu_custom_call.1} parent=1 // pred_fallthru
      _
    %436 = vsyncpa [#allocation3], 1
    %437 = vsyncpa [#allocation6], 1
    %438 = vsyncpa [#allocation4], 1

</llo_original>
